<compile_context>
chip_gen: v6e
topology: v6e:2x2x1
jax: 0.10.0
libtpu: 0.0.40
codegen_flags: <defaults>
</compile_context>

<pallas_src>
import functools
import math

import jax
import jax.numpy as jnp
from jax import lax
from jax.experimental import pallas as pl
from jax.experimental.pallas import tpu as pltpu


def _attention_block(q, k, v, scale, w_dtype, o_dtype, mask=None):
    """q: (tq, D), k: (Sk, D), v: (Sk, Dv), mask: optional (tq, Sk) int8."""
    scale = jnp.float32(scale)
    prescaled = q.dtype == jnp.float32
    if prescaled:
        # Folding the scale into q is exact in f32 and costs tq*D mults, not tq*Sk.
        q = q * scale

    # QK^T contracting on D of both operands (no explicit k.T / XLU transpose),
    # native-dtype MXU operands, f32 accumulation.
    s = lax.dot_general(
        q, k,
        dimension_numbers=(((1,), (1,)), ((), ())),
        preferred_element_type=jnp.float32,
    )  # (tq, Sk) float32
    if not prescaled:
        # Low-precision inputs: scale the f32 scores for exact reference parity.
        s = s * scale

    if mask is not None:
        # masked_fill(~mask, -inf) semantics. Fully-masked rows produce NaN,
        # exactly like the torch reference (softmax of all -inf).
        # TODO(synk): on v5e (compute-bound) an additive 0/-inf bias would replace
        # the int8 compare+select; on v6e/v7x (mem-bound) int8 mask DMA is cheaper.
        s = jnp.where(mask != 0, s, -jnp.inf)

    # Numerically-stable softmax, all in f32 (v5e VPU/EUP have no bf16).
    m = jnp.max(s, axis=-1, keepdims=True)
    e = jnp.exp(s - m)
    denom = jnp.sum(e, axis=-1, keepdims=True)

    low_precision = (jnp.dtype(w_dtype).itemsize < 4
                     and jnp.dtype(o_dtype).itemsize < 4)
    if low_precision:
        # EUP slot; ~1e-4 relative error is below bf16 output precision.
        inv = pl.reciprocal(denom, approx=True)
    else:
        # Exact divide only on the (tq, 1) column so f32 weights stay reference-tight.
        inv = 1.0 / denom
    w_f32 = e * inv  # (tq, Sk)

    # Cast once and reuse for both the PV matmul and the weights output.
    w_mm = w_f32.astype(v.dtype)
    o = jnp.dot(w_mm, v, preferred_element_type=jnp.float32)
    if w_mm.dtype == jnp.dtype(w_dtype):
        w_out = w_mm
    else:
        w_out = w_f32.astype(w_dtype)
    return o.astype(o_dtype), w_out


def _attn_kernel_nomask(q_ref, k_ref, v_ref, o_ref, w_ref, *, scale):
    o, w = _attention_block(q_ref[...], k_ref[...], v_ref[...], scale,
                            w_dtype=w_ref.dtype, o_dtype=o_ref.dtype)
    o_ref[...] = o
    w_ref[...] = w


def _attn_kernel_mask(q_ref, k_ref, v_ref, mask_ref, o_ref, w_ref, *, scale):
    o, w = _attention_block(q_ref[...], k_ref[...], v_ref[...], scale,
                            w_dtype=w_ref.dtype, o_dtype=o_ref.dtype,
                            mask=mask_ref[...])
    o_ref[...] = o
    w_ref[...] = w


def _pick_q_tile(sq, sub, fits, target=256):
    """Query-tile size: full Sq when small & VMEM-fitting (full-extent blocks are
    always layout-legal), else the largest multiple of `sub` <= target that fits."""
    if sq <= sub:
        return sq
    if sq <= target and fits(sq):
        return sq
    tq = min(target, (sq // sub) * sub)
    while tq > sub and not fits(tq):
        tq = max(sub, ((tq // 2) // sub) * sub)
    return tq


def scaled_dot_product_attention_reduced(q, k, v, d_model, mask=None,
                                         weights_dtype=None):
    """Pallas TPU implementation of ScaledDotProductAttentionReduced.forward.

    q: [B, Sq, D], k: [B, Sk, D], v: [B, Sk, Dv], mask: optional [B, Sq, Sk]
    (bool/int; pass int8 to avoid an extra convert pass over HBM).
    Returns (output [B, Sq, Dv], attn_weights [B, Sq, Sk]).
    """
    B, Sq, D = q.shape
    _, Sk, _ = k.shape
    Dv = v.shape[-1]
    scale = 1.0 / math.sqrt(d_model)

    out_dtype = jnp.dtype(q.dtype)
    # TODO(synk): on v6e/v7x the weights writeback dominates HBM traffic for f32
    # inputs; pass weights_dtype=jnp.bfloat16 here if the consumer can accept it.
    w_dtype = jnp.dtype(weights_dtype) if weights_dtype is not None else out_dtype

    has_mask = mask is not None
    if has_mask:
        if mask.dtype == jnp.int8 or mask.dtype == jnp.uint8:
            mask_arg = mask  # pass through: no extra B*Sq*Sk convert pass
        else:
            # TODO(synk): bitcast instead of convert for bool masks once bool
            # refs are reliably supported end-to-end.
            mask_arg = mask.astype(jnp.int8)

    in_itemsize = jnp.dtype(q.dtype).itemsize
    out_itemsize = out_dtype.itemsize
    w_itemsize = w_dtype.itemsize

    # Device-aware VMEM budget (v7x: 64 MiB physical; v5e/v6e: 128 MiB).
    try:
        phys_vmem = int(pltpu.get_tpu_info().vmem_capacity_bytes)
    except Exception:
        phys_vmem = 64 * 1024 * 1024
    budget = int(0.85 * phys_vmem)

    kv_bytes = Sk * (D + Dv) * in_itemsize
    # Single-buffer K/V when double-buffering them would eat too much budget:
    # their block index is constant across the inner query-tile axis, so the
    # second buffer only helps at batch boundaries.
    kv_buffers = 1 if 2 * kv_bytes > budget // 3 else 2

    def est(tq):
        total = kv_buffers * kv_bytes                     # K/V blocks
        total += 2 * tq * D * in_itemsize                 # q (double-buffered)
        total += 2 * tq * Dv * out_itemsize               # output (double-buffered)
        total += 2 * tq * Sk * w_itemsize                 # weights (double-buffered)
        if has_mask:
            total += 2 * tq * Sk                          # int8 mask
        total += 3 * tq * Sk * 4                          # f32 s/e/w intermediates
        return total

    # Dtype-aware sublane multiple: 8 (f32), 16 (bf16), 32 when an int8 mask tile exists.
    sub = max(8, 32 // in_itemsize)
    if has_mask:
        sub = max(sub, 32)
    tq = _pick_q_tile(Sq, sub, lambda t: est(t) <= budget)
    n_q = pl.cdiv(Sq, tq)  # ragged last block handled by Pallas (rows are independent)
    # TODO(synk): if even tq == sub overflows VMEM (very large Sk on v7x), a
    # two-pass Sk-tiled variant (pass 1: row max/denom; pass 2: normalized weight
    # tiles + O accumulation) is required; not implemented here.

    kv_kwargs = {} if kv_buffers == 2 else {"pipeline_mode": pl.Buffered(1)}

    out_shape = (
        jax.ShapeDtypeStruct((B, Sq, Dv), out_dtype),
        jax.ShapeDtypeStruct((B, Sq, Sk), w_dtype),
    )
    out_specs = (
        pl.BlockSpec((pl.Squeezed(), tq, Dv), lambda b, i: (b, i, 0)),
        pl.BlockSpec((pl.Squeezed(), tq, Sk), lambda b, i: (b, i, 0)),
    )
    in_specs = [
        pl.BlockSpec((pl.Squeezed(), tq, D), lambda b, i: (b, i, 0)),
        pl.BlockSpec((pl.Squeezed(), Sk, D), lambda b, i: (b, 0, 0), **kv_kwargs),
        pl.BlockSpec((pl.Squeezed(), Sk, Dv), lambda b, i: (b, 0, 0), **kv_kwargs),
    ]

    # Megacore split on the batch axis when possible so both cores never DMA the
    # same full-Sk K/V for one batch row.
    dim_sem = ("parallel", "arbitrary") if B > 1 else ("parallel", "parallel")
    compiler_params = pltpu.CompilerParams(
        dimension_semantics=dim_sem,
        vmem_limit_bytes=budget,
    )

    bytes_accessed = (B * (Sq * D + Sk * D + Sk * Dv) * in_itemsize
                      + B * Sq * Dv * out_itemsize
                      + B * Sq * Sk * w_itemsize)
    if has_mask:
        bytes_accessed += B * Sq * Sk
    cost = pl.CostEstimate(
        flops=2 * B * Sq * Sk * (D + Dv),
        transcendentals=B * Sq * Sk,
        bytes_accessed=int(bytes_accessed),
    )

    if not has_mask:
        kernel = functools.partial(_attn_kernel_nomask, scale=scale)
        args = (q, k, v)
    else:
        kernel = functools.partial(_attn_kernel_mask, scale=scale)
        in_specs = in_specs + [
            pl.BlockSpec((pl.Squeezed(), tq, Sk), lambda b, i: (b, i, 0)),
        ]
        args = (q, k, v, mask_arg)

    return pl.pallas_call(
        kernel,
        out_shape=out_shape,
        grid_spec=pltpu.PrefetchScalarGridSpec(
            num_scalar_prefetch=0,
            grid=(B, n_q),
            in_specs=in_specs,
            out_specs=out_specs,
        ),
        compiler_params=compiler_params,
        cost_estimate=cost,
    )(*args)


def _reference(q, k, v, d_model, mask=None):
    s = jnp.einsum("bqd,bkd->bqk", q, k) / jnp.sqrt(jnp.float32(d_model))
    if mask is not None:
        s = jnp.where(mask, s, -jnp.inf)
    w = jax.nn.softmax(s, axis=-1)
    o = jnp.einsum("bqk,bkd->bqd", w, v)
    return o, w


if __name__ == "__main__":
    # Small, deterministic example shapes.
    B, Sq, Sk, D = 2, 8, 8, 32
    d_model = D

    key = jax.random.PRNGKey(0)
    kq, kk, kv_, _ = jax.random.split(key, 4)
    q = jax.random.normal(kq, (B, Sq, D), dtype=jnp.float32)
    k = jax.random.normal(kk, (B, Sk, D), dtype=jnp.float32)
    v = jax.random.normal(kv_, (B, Sk, D), dtype=jnp.float32)
    # Boolean mask: True = attend; at least one True per row (lower-triangular).
    mask_bool = jnp.tril(jnp.ones((Sq, Sk), dtype=bool))[None].repeat(B, axis=0)
    mask_i8 = mask_bool.astype(jnp.int8)  # int8 mask: no extra convert pass in the wrapper

    # f32, no mask (exact-divide path, strict tolerance).
    out, attn = scaled_dot_product_attention_reduced(q, k, v, d_model)
    out, attn = jax.block_until_ready((out, attn))
    ref_out, ref_attn = _reference(q, k, v, d_model)
    assert jnp.allclose(out, ref_out, atol=1e-5, rtol=1e-5)
    assert jnp.allclose(attn, ref_attn, atol=1e-5, rtol=1e-5)

    # f32, masked (int8 mask passed straight through).
    out_m, attn_m = scaled_dot_product_attention_reduced(q, k, v, d_model, mask=mask_i8)
    out_m, attn_m = jax.block_until_ready((out_m, attn_m))
    ref_out_m, ref_attn_m = _reference(q, k, v, d_model, mask=mask_bool)
    assert jnp.allclose(out_m, ref_out_m, atol=1e-5, rtol=1e-5)
    assert jnp.allclose(attn_m, ref_attn_m, atol=1e-5, rtol=1e-5)

    # bf16, masked (single-cast weights + approx-reciprocal path).
    qb, kb, vb = (x.astype(jnp.bfloat16) for x in (q, k, v))
    out_b, attn_b = scaled_dot_product_attention_reduced(qb, kb, vb, d_model, mask=mask_i8)
    out_b, attn_b = jax.block_until_ready((out_b, attn_b))
    ref_out_b, ref_attn_b = _reference(qb.astype(jnp.float32), kb.astype(jnp.float32),
                                       vb.astype(jnp.float32), d_model, mask=mask_bool)
    assert jnp.allclose(out_b.astype(jnp.float32), ref_out_b, atol=5e-2, rtol=5e-2)
    assert jnp.allclose(attn_b.astype(jnp.float32), ref_attn_b, atol=5e-2, rtol=5e-2)

    print("KERNEL_OK")
</pallas_src>

<mosaic_0001>
module attributes {stable_mosaic.version = 11 : i64} {
  func.func @_attn_kernel_nomask(%arg0: i32, %arg1: i32, %arg2: memref<1x8x32xf32, #tpu.memory_space<vmem>>, %arg3: memref<1x8x32xf32, #tpu.memory_space<vmem>>, %arg4: memref<1x8x32xf32, #tpu.memory_space<vmem>>, %arg5: memref<1x8x32xf32, #tpu.memory_space<vmem>>, %arg6: memref<1x8x8xf32, #tpu.memory_space<vmem>>) attributes {dimension_semantics = [#tpu.dimension_semantics<parallel>, #tpu.dimension_semantics<arbitrary>], iteration_bounds = array<i64: 2, 1>, scalar_prefetch = 0 : i64, scratch_operands = 0 : i64, tpu.core_type = #tpu.core_type<tc>, window_params = [{transform_indices = @transform_0, window_bounds = array<i64: 1, 8, 32>}, {transform_indices = @transform_1, window_bounds = array<i64: 1, 8, 32>}, {transform_indices = @transform_2, window_bounds = array<i64: 1, 8, 32>}, {transform_indices = @transform_3, window_bounds = array<i64: 1, 8, 32>}, {transform_indices = @transform_4, window_bounds = array<i64: 1, 8, 8>}]} {
    %c0 = arith.constant 0 : index
    %c0_0 = arith.constant 0 : index
    %c0_1 = arith.constant 0 : index
    %0 = vector.load %arg2[%c0, %c0_0, %c0_1] : memref<1x8x32xf32, #tpu.memory_space<vmem>>, vector<1x8x32xf32>
    %1 = vector.shape_cast %0 : vector<1x8x32xf32> to vector<8x32xf32>
    %c0_2 = arith.constant 0 : index
    %c0_3 = arith.constant 0 : index
    %c0_4 = arith.constant 0 : index
    %2 = vector.load %arg3[%c0_2, %c0_3, %c0_4] : memref<1x8x32xf32, #tpu.memory_space<vmem>>, vector<1x8x32xf32>
    %3 = vector.shape_cast %2 : vector<1x8x32xf32> to vector<8x32xf32>
    %c0_5 = arith.constant 0 : index
    %c0_6 = arith.constant 0 : index
    %c0_7 = arith.constant 0 : index
    %4 = vector.load %arg4[%c0_5, %c0_6, %c0_7] : memref<1x8x32xf32, #tpu.memory_space<vmem>>, vector<1x8x32xf32>
    %5 = vector.shape_cast %4 : vector<1x8x32xf32> to vector<8x32xf32>
    %cst = arith.constant 0.176776692 : f32
    %6 = vector.broadcast %cst : f32 to vector<8x32xf32>
    %7 = arith.mulf %1, %6 : vector<8x32xf32>
    %cst_8 = arith.constant dense<0.000000e+00> : vector<8x8xf32>
    %8 = tpu.matmul %7, %3, %cst_8 {dimension_numbers = #tpu.dot_dimension_numbers<[1], [1], [0], [0], [0, 0, 1, 0], [], []>} : vector<8x32xf32>, vector<8x32xf32>, vector<8x8xf32> -> vector<8x8xf32>
    %cst_9 = arith.constant dense<0xFF800000> : vector<8xf32>
    %9 = vector.multi_reduction <maximumf>, %8, %cst_9 [1] : vector<8x8xf32> to vector<8xf32>
    %10 = vector.shape_cast %9 : vector<8xf32> to vector<8x1xf32>
    %11 = vector.broadcast %10 : vector<8x1xf32> to vector<8x8xf32>
    %12 = arith.subf %8, %11 : vector<8x8xf32>
    %13 = math.exp %12 : vector<8x8xf32>
    %cst_10 = arith.constant dense<0.000000e+00> : vector<8xf32>
    %14 = vector.multi_reduction <add>, %13, %cst_10 [1] : vector<8x8xf32> to vector<8xf32>
    %15 = vector.shape_cast %14 : vector<8xf32> to vector<8x1xf32>
    %cst_11 = arith.constant 1.000000e+00 : f32
    %16 = vector.broadcast %cst_11 : f32 to vector<8x1xf32>
    %17 = arith.divf %16, %15 : vector<8x1xf32>
    %18 = vector.broadcast %17 : vector<8x1xf32> to vector<8x8xf32>
    %19 = arith.mulf %13, %18 : vector<8x8xf32>
    %cst_12 = arith.constant dense<0.000000e+00> : vector<8x32xf32>
    %20 = tpu.matmul %19, %5, %cst_12 {dimension_numbers = #tpu.dot_dimension_numbers<[1], [0], [0], [1], [0, 0, 1, 1], [], []>} : vector<8x8xf32>, vector<8x32xf32>, vector<8x32xf32> -> vector<8x32xf32>
    %c0_13 = arith.constant 0 : index
    %c0_14 = arith.constant 0 : index
    %c0_15 = arith.constant 0 : index
    %21 = vector.load %arg5[%c0_13, %c0_14, %c0_15] : memref<1x8x32xf32, #tpu.memory_space<vmem>>, vector<1x8x32xf32>
    %22 = vector.shape_cast %21 : vector<1x8x32xf32> to vector<8x32xf32>
    %23 = vector.shape_cast %20 : vector<8x32xf32> to vector<1x8x32xf32>
    tpu.vector_store %arg5[%c0_13, %c0_14, %c0_15], %23 {strides = array<i32>} : memref<1x8x32xf32, #tpu.memory_space<vmem>>, vector<1x8x32xf32>,
    %c0_16 = arith.constant 0 : index
    %c0_17 = arith.constant 0 : index
    %c0_18 = arith.constant 0 : index
    %24 = vector.load %arg6[%c0_16, %c0_17, %c0_18] : memref<1x8x8xf32, #tpu.memory_space<vmem>>, vector<1x8x8xf32>
    %25 = vector.shape_cast %24 : vector<1x8x8xf32> to vector<8x8xf32>
    %26 = vector.shape_cast %19 : vector<8x8xf32> to vector<1x8x8xf32>
    tpu.vector_store %arg6[%c0_16, %c0_17, %c0_18], %26 {strides = array<i32>} : memref<1x8x8xf32, #tpu.memory_space<vmem>>, vector<1x8x8xf32>,
    return
  }
  func.func @transform_0(%arg0: i32, %arg1: i32) -> (i32, i32, i32) {
    %c0_i32 = arith.constant 0 : i32
    %c0_i32_0 = arith.constant 0 : i32
    return %arg0, %arg1, %c0_i32 : i32, i32, i32
  }
  func.func @transform_1(%arg0: i32, %arg1: i32) -> (i32, i32, i32) {
    %c0_i32 = arith.constant 0 : i32
    %c0_i32_0 = arith.constant 0 : i32
    %c0_i32_1 = arith.constant 0 : i32
    return %arg0, %c0_i32, %c0_i32_0 : i32, i32, i32
  }
  func.func @transform_2(%arg0: i32, %arg1: i32) -> (i32, i32, i32) {
    %c0_i32 = arith.constant 0 : i32
    %c0_i32_0 = arith.constant 0 : i32
    %c0_i32_1 = arith.constant 0 : i32
    return %arg0, %c0_i32, %c0_i32_0 : i32, i32, i32
  }
  func.func @transform_3(%arg0: i32, %arg1: i32) -> (i32, i32, i32) {
    %c0_i32 = arith.constant 0 : i32
    %c0_i32_0 = arith.constant 0 : i32
    return %arg0, %arg1, %c0_i32 : i32, i32, i32
  }
  func.func @transform_4(%arg0: i32, %arg1: i32) -> (i32, i32, i32) {
    %c0_i32 = arith.constant 0 : i32
    %c0_i32_0 = arith.constant 0 : i32
    return %arg0, %arg1, %c0_i32 : i32, i32, i32
  }
}

</mosaic_0001>

<llo_original>
// kernel: tpu_custom_call.1
$region0: #{tpu_custom_call.1}
  #allocation0 [shape = 'u32[]', space=smem, size = 0x4, offset = 0x4, fixed_abs, tag = 'smem constant byte address 0x4 - core index']
  #allocation1 [shape = 'u32[144,128]{1,0:T(1,128)}', space=vmem, size = 0x12000, scoped, tag = 'internal scratch']
  %s0 = inlined_call_operand.hbm [shape: f32[2,8,32], index: 0, kind: input, shape index: {}]
  %s1 = inlined_call_operand.hbm [shape: f32[2,8,32], index: 1, kind: input, shape index: {}]
  %s2 = inlined_call_operand.hbm [shape: f32[2,8,32], index: 2, kind: input, shape index: {}]
  %s3 = inlined_call_operand.hbm [shape: f32[2,8,32], index: 3, kind: output, shape index: {0}]
  %s4 = inlined_call_operand.hbm [shape: f32[2,8,8], index: 4, kind: output, shape index: {1}]
  %5 = xla_tuple %s3, %s4
  %s6 = sld [smem:[#allocation0]]
  $region65: #{tpu_custom_call.1} parent=0
    _
  %s8 = ssub.s32 1, %s6
  %s9 = scalar_select 0, %s8, %s6
  $region1: #{tpu_custom_call.1} parent=0
    #allocation2 [shape = 'u8[8192]{0}', space=vmem, size = 0x2000, scoped, tag = 'input window, operand 0']
    #allocation3 [shape = 's32[2]{0}', space=sflag, size = 0x8, scoped, tag = 'scoped memory for tpu_custom_call.1']
    #allocation4 [shape = 's32[2]{0}', space=sflag, size = 0x8, scoped, tag = 'scoped memory for tpu_custom_call.1']
    #allocation5 [shape = 'u8[8192]{0}', space=vmem, size = 0x2000, scoped, tag = 'input window, operand 1']
    #allocation6 [shape = 's32[2]{0}', space=sflag, size = 0x8, scoped, tag = 'scoped memory for tpu_custom_call.1']
    #allocation7 [shape = 'u8[8192]{0}', space=vmem, size = 0x2000, scoped, tag = 'input window, operand 2']
    #allocation8 [shape = 'u8[8192]{0}', space=vmem, size = 0x2000, scoped, tag = 'output window, operand 0']
    #allocation9 [shape = 'u8[8192]{0}', space=vmem, size = 0x2000, scoped, tag = 'output window, operand 1']
    #allocation10 [shape = 's32[2]{0}', space=sflag, size = 0x8, scoped, tag = 'scoped memory for tpu_custom_call.1']
    %10 = vsyncpa [#allocation3], 0
    %s11 = scalar_lea.sflag [#allocation3], 1
    %12 = vsyncpa %s11, 0
    %13 = vsyncpa [#allocation6], 0
    %s14 = scalar_lea.sflag [#allocation6], 1
    %15 = vsyncpa %s14, 0
    %16 = vsyncpa [#allocation4], 0
    %s17 = scalar_lea.sflag [#allocation4], 1
    %18 = vsyncpa %s17, 0
    %19 = vsyncpa [#allocation10], 0
    %s20 = scalar_lea.sflag [#allocation10], 1
    %21 = vsyncpa %s20, 0
    loop: start=0, step=1, limit=4
    $region2: #{tpu_custom_call.1} parent=1 // loop_pre_header
      _
    $region3: #{tpu_custom_call.1} parent=1 // loop_header
      %s23 = sphi 0, %s27
      %p24 = scmp.ge.s32.totalorder %s23, 4
      %s30 = sphi 0, %s42
      %s31 = sphi 0, %s38
      %s32 = sphi 0, %s30
      %s33 = sphi 0, %s31
      %s34 = sphi 0, %s32
      %s35 = sphi 0, %s33
      %s47 = sphi 0, %s49
      %s50 = sphi 0, %s47
      %s51 = sphi 0, %s50
      %s67 = sphi 0, %s51
      %s73 = sphi 0, %s75
      %s76 = sphi 0, %s73
      %s77 = sphi 0, %s76
      %s93 = sphi 0, %s77
      %s99 = sphi 0, %s101
      %s102 = sphi 0, %s99
      %s103 = sphi 0, %s102
      %s119 = sphi 0, %s103
      %s127 = sphi 0, %s129
      %s130 = sphi 0, %s127
      %s131 = sphi 0, %s130
      %s147 = sphi 0, %s131
      %s155 = sphi 0, %s157
      %s158 = sphi 0, %s155
      %s159 = sphi 0, %s158
      %s175 = sphi 0, %s159
    $region4: #{tpu_custom_call.1} parent=1 // loop_header_branch
      %26 = sbr.rel (%p24) target = $region8
    $region5: #{tpu_custom_call.1} parent=1 // loop_body
      %s28 = ssub.s32 %s23, 1
      %s29 = ssub.s32 %s23, 2
      %s36 = sadd.s32 1, %s31
      %p37 = scmp.ge.s32.totalorder %s36, 1
      %s38 = scalar_select %p37, 0, %s36
      %s39 = sadd.s32 1, %s30
      %s40 = scalar_select %p37, %s39, %s30
      %p41 = scmp.ge.s32.totalorder %s40, 2
      %s42 = scalar_select %p41, 0, %s40
      %s43 = ssub.s32 %s30, %s42
      %s44 = ssub.s32 %s31, %s38
      %s45 = sor.u32 %s43, %s44
      %p46 = scmp.eq.s32.totalorder %s45, 0
      %s48 = sadd.s32 %s47, 1
      %s49 = scalar_select %p46, %s47, %s48
      %p52 = pneg %p46
      %p53 = scmp.eq.s32.totalorder %s23, 1
      %p54 = por %p52, %p53
      %p55 = scmp.ne.s32.totalorder %s47, %s50
      %p56 = scmp.eq.s32.totalorder %s23, 0
      %p57 = por %p55, %p56
      %p58 = scmp.ne.s32.totalorder %s47, %s50
      %p59 = scmp.eq.s32.totalorder %s28, 1
      %p60 = por %p58, %p59
      %p61 = scmp.ne.s32.totalorder %s50, %s51
      %p62 = scmp.eq.s32.totalorder %s28, 0
      %p63 = por %p61, %p62
      %p64 = scmp.ne.s32.totalorder %s50, %s51
      %p65 = scmp.eq.s32.totalorder %s29, 1
      %p66 = por %p64, %p65
      %p68 = scmp.ne.s32.totalorder %s51, %s67
      %p69 = scmp.eq.s32.totalorder %s29, 0
      %p70 = por %p68, %p69
      %s71 = ssub.s32 %s30, %s42
      %p72 = scmp.eq.s32.totalorder %s71, 0
      %s74 = sadd.s32 %s73, 1
      %s75 = scalar_select %p72, %s73, %s74
      %p78 = pneg %p72
      %p79 = scmp.eq.s32.totalorder %s23, 1
      %p80 = por %p78, %p79
      %p81 = scmp.ne.s32.totalorder %s73, %s76
      %p82 = scmp.eq.s32.totalorder %s23, 0
      %p83 = por %p81, %p82
      %p84 = scmp.ne.s32.totalorder %s73, %s76
      %p85 = scmp.eq.s32.totalorder %s28, 1
      %p86 = por %p84, %p85
      %p87 = scmp.ne.s32.totalorder %s76, %s77
      %p88 = scmp.eq.s32.totalorder %s28, 0
      %p89 = por %p87, %p88
      %p90 = scmp.ne.s32.totalorder %s76, %s77
      %p91 = scmp.eq.s32.totalorder %s29, 1
      %p92 = por %p90, %p91
      %p94 = scmp.ne.s32.totalorder %s77, %s93
      %p95 = scmp.eq.s32.totalorder %s29, 0
      %p96 = por %p94, %p95
      %s97 = ssub.s32 %s30, %s42
      %p98 = scmp.eq.s32.totalorder %s97, 0
      %s100 = sadd.s32 %s99, 1
      %s101 = scalar_select %p98, %s99, %s100
      %p104 = pneg %p98
      %p105 = scmp.eq.s32.totalorder %s23, 1
      %p106 = por %p104, %p105
      %p107 = scmp.ne.s32.totalorder %s99, %s102
      %p108 = scmp.eq.s32.totalorder %s23, 0
      %p109 = por %p107, %p108
      %p110 = scmp.ne.s32.totalorder %s99, %s102
      %p111 = scmp.eq.s32.totalorder %s28, 1
      %p112 = por %p110, %p111
      %p113 = scmp.ne.s32.totalorder %s102, %s103
      %p114 = scmp.eq.s32.totalorder %s28, 0
      %p115 = por %p113, %p114
      %p116 = scmp.ne.s32.totalorder %s102, %s103
      %p117 = scmp.eq.s32.totalorder %s29, 1
      %p118 = por %p116, %p117
      %p120 = scmp.ne.s32.totalorder %s103, %s119
      %p121 = scmp.eq.s32.totalorder %s29, 0
      %p122 = por %p120, %p121
      %s123 = ssub.s32 %s30, %s42
      %s124 = ssub.s32 %s31, %s38
      %s125 = sor.u32 %s123, %s124
      %p126 = scmp.eq.s32.totalorder %s125, 0
      %s128 = sadd.s32 %s127, 1
      %s129 = scalar_select %p126, %s127, %s128
      %p132 = pneg %p126
      %p133 = scmp.eq.s32.totalorder %s23, 1
      %p134 = por %p132, %p133
      %p135 = scmp.ne.s32.totalorder %s127, %s130
      %p136 = scmp.eq.s32.totalorder %s23, 0
      %p137 = por %p135, %p136
      %p138 = scmp.ne.s32.totalorder %s127, %s130
      %p139 = scmp.eq.s32.totalorder %s28, 1
      %p140 = por %p138, %p139
      %p141 = scmp.ne.s32.totalorder %s130, %s131
      %p142 = scmp.eq.s32.totalorder %s28, 0
      %p143 = por %p141, %p142
      %p144 = scmp.ne.s32.totalorder %s130, %s131
      %p145 = scmp.eq.s32.totalorder %s29, 1
      %p146 = por %p144, %p145
      %p148 = scmp.ne.s32.totalorder %s131, %s147
      %p149 = scmp.eq.s32.totalorder %s29, 0
      %p150 = por %p148, %p149
      %s151 = ssub.s32 %s30, %s42
      %s152 = ssub.s32 %s31, %s38
      %s153 = sor.u32 %s151, %s152
      %p154 = scmp.eq.s32.totalorder %s153, 0
      %s156 = sadd.s32 %s155, 1
      %s157 = scalar_select %p154, %s155, %s156
      %p160 = pneg %p154
      %p161 = scmp.eq.s32.totalorder %s23, 1
      %p162 = por %p160, %p161
      %p163 = scmp.ne.s32.totalorder %s155, %s158
      %p164 = scmp.eq.s32.totalorder %s23, 0
      %p165 = por %p163, %p164
      %p166 = scmp.ne.s32.totalorder %s155, %s158
      %p167 = scmp.eq.s32.totalorder %s28, 1
      %p168 = por %p166, %p167
      %p169 = scmp.ne.s32.totalorder %s158, %s159
      %p170 = scmp.eq.s32.totalorder %s28, 0
      %p171 = por %p169, %p170
      %p172 = scmp.ne.s32.totalorder %s158, %s159
      %p173 = scmp.eq.s32.totalorder %s29, 1
      %p174 = por %p172, %p173
      %p176 = scmp.ne.s32.totalorder %s159, %s175
      %p177 = scmp.eq.s32.totalorder %s29, 0
      %p178 = por %p176, %p177
      %p179 = scmp.le.s32.totalorder 1, %s23
      %p180 = scmp.lt.s32.totalorder %s23, 3
      %p181 = pnand %p179, %p180
      %p182 = pneg %p181
      // Predicated region
      $region9: #{tpu_custom_call.1} parent=5 // pred_check
        _
      $region10: #{tpu_custom_call.1} parent=5 // pred_check_branch
        %184 = sbr.rel (%p181) target = $region12
      $region11: #{tpu_custom_call.1} parent=5 // pred_region
        %s185 = ssub.s32 %s23, 1
      $region12: #{tpu_custom_call.1} parent=5 // pred_fallthru
        _
      %p186 = scmp.lt.s32.totalorder %s23, 2
      // Predicated region
      $region13: #{tpu_custom_call.1} parent=5 // pred_check
        %p187 = pneg %p186
      $region14: #{tpu_custom_call.1} parent=5 // pred_check_branch
        %189 = sbr.rel (%p187) target = $region16
      $region15: #{tpu_custom_call.1} parent=5 // pred_region
        // Predicated region
        $region17: #{tpu_custom_call.1} parent=15 // pred_check
          %p190 = pneg %p57
        $region18: #{tpu_custom_call.1} parent=15 // pred_check_branch
          %192 = sbr.rel (%p190) target = $region20
        $region19: #{tpu_custom_call.1} parent=15 // pred_region
          %s193 = sand.u32 %s47, 1
          %s194 = scalar_lea.sflag [#allocation3], %s193
          %s195 = sand.u32 %s47, 1
          %s196 = smul.addr %s195, 8
          %s197 = scalar_lea.vmem [#allocation2], %s196
          %s199 = ssub.s32 128, 128
          %200 = vsyncadd %s194, %s199
          %s201 = sadd.s32 %s31, %s30
          %s202 = smul.addr %s201, 128
          %s203 = scalar_lea.hbm %s0, %s202
          %s205 = sshll.u32 %s197, 4
          %s206 = int_to_ptr.vmem [resolvable:$true] %s205
          %208 = dma.hbm_to_vmem [thread:$0]  %s203, 128, %s206, %s194
        $region20: #{tpu_custom_call.1} parent=15 // pred_fallthru
          _
        // Predicated region
        $region21: #{tpu_custom_call.1} parent=15 // pred_check
          %p209 = pneg %p83
        $region22: #{tpu_custom_call.1} parent=15 // pred_check_branch
          %211 = sbr.rel (%p209) target = $region24
        $region23: #{tpu_custom_call.1} parent=15 // pred_region
          %s212 = sand.u32 %s23, 1
          %s213 = scalar_lea.sflag [#allocation6], %s212
          %s214 = sand.u32 %s73, 1
          %s215 = smul.addr %s214, 8
          %s216 = scalar_lea.vmem [#allocation5], %s215
          %s218 = ssub.s32 128, 128
          %219 = vsyncadd %s213, %s218
          %s220 = smul.addr %s30, 128
          %s221 = scalar_lea.hbm %s1, %s220
          %s223 = sshll.u32 %s216, 4
          %s224 = int_to_ptr.vmem [resolvable:$true] %s223
          %226 = dma.hbm_to_vmem [thread:$0]  %s221, 128, %s224, %s213
        $region24: #{tpu_custom_call.1} parent=15 // pred_fallthru
          _
        // Predicated region
        $region25: #{tpu_custom_call.1} parent=15 // pred_check
          %p227 = pneg %p109
        $region26: #{tpu_custom_call.1} parent=15 // pred_check_branch
          %229 = sbr.rel (%p227) target = $region28
        $region27: #{tpu_custom_call.1} parent=15 // pred_region
          %s230 = sand.u32 %s23, 1
          %s231 = scalar_lea.sflag [#allocation6], %s230
          %s232 = sand.u32 %s99, 1
          %s233 = smul.addr %s232, 8
          %s234 = scalar_lea.vmem [#allocation7], %s233
          %s236 = ssub.s32 128, 128
          %237 = vsyncadd %s231, %s236
          %s238 = smul.addr %s30, 128
          %s239 = scalar_lea.hbm %s2, %s238
          %s241 = sshll.u32 %s234, 4
          %s242 = int_to_ptr.vmem [resolvable:$true] %s241
          %244 = dma.hbm_to_vmem [thread:$0]  %s239, 128, %s242, %s231
        $region28: #{tpu_custom_call.1} parent=15 // pred_fallthru
          _
      $region16: #{tpu_custom_call.1} parent=5 // pred_fallthru
        _
      %p245 = scmp.le.s32.totalorder 1, %s23
      %p246 = scmp.lt.s32.totalorder %s23, 3
      %p247 = pnand %p245, %p246
      %p248 = pneg %p247
      // Predicated region
      $region29: #{tpu_custom_call.1} parent=5 // pred_check
        _
      $region30: #{tpu_custom_call.1} parent=5 // pred_check_branch
        %250 = sbr.rel (%p247) target = $region32
      $region31: #{tpu_custom_call.1} parent=5 // pred_region
        %s251 = ssub.s32 %s23, 1
        %s252 = sand.u32 %s50, 1
        %s253 = scalar_lea.sflag [#allocation3], %s252
        %s254 = sand.u32 %s50, 1
        %s255 = smul.addr %s254, 8
        %s256 = scalar_lea.vmem [#allocation2], %s255
        // Predicated region
        $region33: #{tpu_custom_call.1} parent=31 // pred_check
          %p257 = pneg %p63
        $region34: #{tpu_custom_call.1} parent=31 // pred_check_branch
          %259 = sbr.rel (%p257) target = $region36
        $region35: #{tpu_custom_call.1} parent=31 // pred_region
          %260 = dma.done %s253, 128
        $region36: #{tpu_custom_call.1} parent=31 // pred_fallthru
          _
        %s261 = sand.u32 %s28, 1
        %s262 = scalar_lea.sflag [#allocation6], %s261
        %s263 = sand.u32 %s76, 1
        %s264 = smul.addr %s263, 8
        %s265 = scalar_lea.vmem [#allocation5], %s264
        // Predicated region
        $region37: #{tpu_custom_call.1} parent=31 // pred_check
          %p266 = pneg %p89
        $region38: #{tpu_custom_call.1} parent=31 // pred_check_branch
          %268 = sbr.rel (%p266) target = $region40
        $region39: #{tpu_custom_call.1} parent=31 // pred_region
          %269 = dma.done %s262, 128
        $region40: #{tpu_custom_call.1} parent=31 // pred_fallthru
          _
        %s270 = sand.u32 %s28, 1
        %s271 = scalar_lea.sflag [#allocation6], %s270
        %s272 = sand.u32 %s102, 1
        %s273 = smul.addr %s272, 8
        %s274 = scalar_lea.vmem [#allocation7], %s273
        // Predicated region
        $region41: #{tpu_custom_call.1} parent=31 // pred_check
          %p275 = pneg %p115
        $region42: #{tpu_custom_call.1} parent=31 // pred_check_branch
          %277 = sbr.rel (%p275) target = $region44
        $region43: #{tpu_custom_call.1} parent=31 // pred_region
          %278 = dma.done %s271, 128
        $region44: #{tpu_custom_call.1} parent=31 // pred_fallthru
          _
        %s279 = sand.u32 %s50, 1
        %s280 = scalar_lea.sflag [#allocation3], %s279
        %s281 = sand.u32 %s50, 1
        %s282 = smul.addr %s281, 8
        %s283 = scalar_lea.vmem [#allocation2], %s282
        %p284 = pneg %p63
        %p285 = pneg %p60
        %s286 = sand.u32 %s28, 1
        %s287 = scalar_lea.sflag [#allocation6], %s286
        %s288 = sand.u32 %s76, 1
        %s289 = smul.addr %s288, 8
        %s290 = scalar_lea.vmem [#allocation5], %s289
        %p291 = pneg %p89
        %p292 = pneg %p86
        %s293 = sand.u32 %s28, 1
        %s294 = scalar_lea.sflag [#allocation6], %s293
        %s295 = sand.u32 %s102, 1
        %s296 = smul.addr %s295, 8
        %s297 = scalar_lea.vmem [#allocation7], %s296
        %p298 = pneg %p115
        %p299 = pneg %p112
        %p300 = pneg %p143
        %p301 = pneg %p140
        %s302 = sand.u32 %s130, 1
        %s303 = scalar_lea.sflag [#allocation4], %s302
        %s304 = sand.u32 %s130, 1
        %s305 = smul.addr %s304, 8
        %s306 = scalar_lea.vmem [#allocation8], %s305
        %p307 = pneg %p171
        %p308 = pneg %p168
        %s309 = sand.u32 %s158, 1
        %s310 = scalar_lea.sflag [#allocation10], %s309
        %s311 = sand.u32 %s158, 1
        %s312 = smul.addr %s311, 8
        %s313 = scalar_lea.vmem [#allocation9], %s312
        %v314 = vld [vmem:[%s256] sm:$0xff]
        %v315 = vld [vmem:[%s265] sm:$0xff]
        %v316 = vld [vmem:[%s274] sm:$0xff]
        %v317 = vmul.f32 %v314, 0.17677669
        %vm318 = vcmask 261120
        %v320 = vsel %vm318, %v317, 0
        %v323 = vsel %vm318, %v315, 0
        %325 = vmatprep.subr.mxu0 0.0
        %326 = vmatpush1.xpose.msra.mxu0 0.0
        %327 = vmatprep.subr.mxu0 0.0
        %328 = vmatpush1.xpose.msra.mxu0 0.0
        %329 = vmatprep.subr.mxu0 0.0
        %330 = vmatpush1.xpose.msra.mxu0 0.0
        %331 = vmatprep.subr.mxu0 0.0
        %332 = vmatpush1.xpose.msra.mxu0 0.0
        %333 = vmatprep.subr.mxu0 0.0
        %334 = vmatpush1.xpose.msra.mxu0 0.0
        %335 = vmatprep.subr.mxu0 0.0
        %336 = vmatpush1.xpose.msra.mxu0 0.0
        %337 = vmatprep.subr.mxu0 0.0
        %338 = vmatpush1.xpose.msra.mxu0 0.0
        %339 = vmatprep.subr.mxu0 0.0
        %340 = vmatpush1.xpose.msra.mxu0 0.0
        %341 = vmatprep.subr.mxu0 0.0
        %342 = vmatpush1.xpose.msra.mxu0 0.0
        %343 = vmatprep.subr.mxu0 0.0
        %344 = vmatpush1.xpose.msra.mxu0 0.0
        %345 = vmatprep.subr.mxu0 0.0
        %346 = vmatpush1.xpose.msra.mxu0 0.0
        %347 = vmatprep.subr.mxu0 0.0
        %348 = vmatpush1.xpose.msra.mxu0 0.0
        %349 = vmatprep.subr.mxu0 0.0
        %350 = vmatpush1.xpose.msra.mxu0 0.0
        %351 = vmatprep.subr.mxu0 0.0
        %352 = vmatpush1.xpose.msra.mxu0 0.0
        %353 = vmatprep.subr.mxu0 0.0
        %354 = vmatpush1.xpose.msra.mxu0 0.0
        %355 = vmatprep.subr.mxu0 0.0
        %356 = vmatpush1.xpose.msra.mxu0 %v323
        %357 = vmatprep.subr.mxu0 0.0
        %358 = vmatpush2.xpose.msra.mxu0 0.0
        %359 = vmatprep.subr.mxu0 0.0
        %360 = vmatpush2.xpose.msra.mxu0 0.0
        %361 = vmatprep.subr.mxu0 0.0
        %362 = vmatpush2.xpose.msra.mxu0 0.0
        %363 = vmatprep.subr.mxu0 0.0
        %364 = vmatpush2.xpose.msra.mxu0 0.0
        %365 = vmatprep.subr.mxu0 0.0
        %366 = vmatpush2.xpose.msra.mxu0 0.0
        %367 = vmatprep.subr.mxu0 0.0
        %368 = vmatpush2.xpose.msra.mxu0 0.0
        %369 = vmatprep.subr.mxu0 0.0
        %370 = vmatpush2.xpose.msra.mxu0 0.0
        %371 = vmatprep.subr.mxu0 0.0
        %372 = vmatpush2.xpose.msra.mxu0 0.0
        %373 = vmatprep.subr.mxu0 0.0
        %374 = vmatpush2.xpose.msra.mxu0 0.0
        %375 = vmatprep.subr.mxu0 0.0
        %376 = vmatpush2.xpose.msra.mxu0 0.0
        %377 = vmatprep.subr.mxu0 0.0
        %378 = vmatpush2.xpose.msra.mxu0 0.0
        %379 = vmatprep.subr.mxu0 0.0
        %380 = vmatpush2.xpose.msra.mxu0 0.0
        %381 = vmatprep.subr.mxu0 0.0
        %382 = vmatpush2.xpose.msra.mxu0 0.0
        %383 = vmatprep.subr.mxu0 0.0
        %384 = vmatpush2.xpose.msra.mxu0 0.0
        %385 = vmatprep.subr.mxu0 0.0
        %386 = vmatpush2.xpose.msra.mxu0 0.0
        %387 = vmatprep.subr.mxu0 0.0
        %388 = vmatpush2.xpose.msra.mxu0 0.0
        %389 = vmatprep.mubr.f32.mxu0 0.0
        %390 = vmatmul.mubr.f32.gmra.mxu0 %v320
        %v391 = vpop.f32.mrf.mxu0
        %v392 = vadd.f32 0.0, %v391
        %v393 = vpop.f32.mrf.mxu0
        %394 = vdwg.mxu0
        %vm395 = vcmask 64512
        %v396 = vsel %vm395, %v392, -inf
        %397 = vmax.xlane.f32.xlu0 %v396
        %v398 = vpop.xlane.xlu0 %397
        %v399 = vsub.f32 %v392, %v398
        %v400 = vmul.f32 %v399, 1.442695
        %v401 = vpow.pop %v400
        %v402 = vsel %vm395, %v401, 0.0
        %403 = vadd.xlane.f32.xlu0 %v402
        %v404 = vpop.xlane.xlu0 %403
        %v405 = vrcp.pop %v404
        %v406 = vmul.f32 1.0, %v405
        %v407 = vmul.f32 %v401, %v406
        %v409 = vsel %vm395, %v407, 0
        %411 = vmatprep.subr.mxu0 0.0
        %412 = vmatpush1.msra.mxu0 0.0
        %413 = vmatprep.subr.mxu0 0.0
        %414 = vmatpush1.msra.mxu0 0.0
        %415 = vmatprep.subr.mxu0 0.0
        %416 = vmatpush1.msra.mxu0 0.0
        %417 = vmatprep.subr.mxu0 0.0
        %418 = vmatpush1.msra.mxu0 0.0
        %419 = vmatprep.subr.mxu0 0.0
        %420 = vmatpush1.msra.mxu0 0.0
        %421 = vmatprep.subr.mxu0 0.0
        %422 = vmatpush1.msra.mxu0 0.0
        %423 = vmatprep.subr.mxu0 0.0
        %424 = vmatpush1.msra.mxu0 0.0
        %425 = vmatprep.subr.mxu0 0.0
        %426 = vmatpush1.msra.mxu0 0.0
        %427 = vmatprep.subr.mxu0 0.0
        %428 = vmatpush1.msra.mxu0 0.0
        %429 = vmatprep.subr.mxu0 0.0
        %430 = vmatpush1.msra.mxu0 0.0
        %431 = vmatprep.subr.mxu0 0.0
        %432 = vmatpush1.msra.mxu0 0.0
        %433 = vmatprep.subr.mxu0 0.0
        %434 = vmatpush1.msra.mxu0 0.0
        %435 = vmatprep.subr.mxu0 0.0
        %436 = vmatpush1.msra.mxu0 0.0
        %437 = vmatprep.subr.mxu0 0.0
        %438 = vmatpush1.msra.mxu0 0.0
        %439 = vmatprep.subr.mxu0 0.0
        %440 = vmatpush1.msra.mxu0 0.0
        %441 = vmatprep.subr.mxu0 0.0
        %442 = vmatpush1.msra.mxu0 %v316
        %443 = vmatprep.subr.mxu0 0.0
        %444 = vmatpush2.msra.mxu0 0.0
        %445 = vmatprep.subr.mxu0 0.0
        %446 = vmatpush2.msra.mxu0 0.0
        %447 = vmatprep.subr.mxu0 0.0
        %448 = vmatpush2.msra.mxu0 0.0
        %449 = vmatprep.subr.mxu0 0.0
        %450 = vmatpush2.msra.mxu0 0.0
        %451 = vmatprep.subr.mxu0 0.0
        %452 = vmatpush2.msra.mxu0 0.0
        %453 = vmatprep.subr.mxu0 0.0
        %454 = vmatpush2.msra.mxu0 0.0
        %455 = vmatprep.subr.mxu0 0.0
        %456 = vmatpush2.msra.mxu0 0.0
        %457 = vmatprep.subr.mxu0 0.0
        %458 = vmatpush2.msra.mxu0 0.0
        %459 = vmatprep.subr.mxu0 0.0
        %460 = vmatpush2.msra.mxu0 0.0
        %461 = vmatprep.subr.mxu0 0.0
        %462 = vmatpush2.msra.mxu0 0.0
        %463 = vmatprep.subr.mxu0 0.0
        %464 = vmatpush2.msra.mxu0 0.0
        %465 = vmatprep.subr.mxu0 0.0
        %466 = vmatpush2.msra.mxu0 0.0
        %467 = vmatprep.subr.mxu0 0.0
        %468 = vmatpush2.msra.mxu0 0.0
        %469 = vmatprep.subr.mxu0 0.0
        %470 = vmatpush2.msra.mxu0 0.0
        %471 = vmatprep.subr.mxu0 0.0
        %472 = vmatpush2.msra.mxu0 0.0
        %473 = vmatprep.subr.mxu0 0.0
        %474 = vmatpush2.msra.mxu0 0.0
        %475 = vmatprep.mubr.f32.mxu0 0.0
        %476 = vmatmul.mubr.f32.gmra.mxu0 %v409
        %v477 = vpop.f32.mrf.mxu0
        %v478 = vadd.f32 0.0, %v477
        %v479 = vpop.f32.mrf.mxu0
        %480 = vdwg.mxu0
        %481 = vst.msk [vmem:[%s306] sm:$0xff] %vm318, %v478
        %482 = vst.msk [vmem:[%s313] sm:$0xff] %vm395, %v407
        %s483 = sand.u32 %s130, 1
        %s484 = scalar_lea.sflag [#allocation4], %s483
        %s485 = sand.u32 %s130, 1
        %s486 = smul.addr %s485, 8
        %s487 = scalar_lea.vmem [#allocation8], %s486
        %s488 = sand.u32 %s158, 1
        %s489 = scalar_lea.sflag [#allocation10], %s488
        %s490 = sand.u32 %s158, 1
        %s491 = smul.addr %s490, 8
        %s492 = scalar_lea.vmem [#allocation9], %s491
        // Predicated region
        $region45: #{tpu_custom_call.1} parent=31 // pred_check
          %p493 = pneg %p140
        $region46: #{tpu_custom_call.1} parent=31 // pred_check_branch
          %495 = sbr.rel (%p493) target = $region48
        $region47: #{tpu_custom_call.1} parent=31 // pred_region
          %s497 = ssub.s32 128, 128
          %498 = vsyncadd %s484, %s497
          %s499 = sadd.s32 %s33, %s32
          %s500 = smul.addr %s499, 128
          %s501 = scalar_lea.hbm %s3, %s500
          %s503 = sshll.u32 %s487, 4
          %s504 = int_to_ptr.vmem [resolvable:$true] %s503
          %506 = dma.vmem_to_hbm [thread:$0]  %s504, 128, %s501, %s484
        $region48: #{tpu_custom_call.1} parent=31 // pred_fallthru
          _
        // Predicated region
        $region49: #{tpu_custom_call.1} parent=31 // pred_check
          %p507 = pneg %p168
        $region50: #{tpu_custom_call.1} parent=31 // pred_check_branch
          %509 = sbr.rel (%p507) target = $region52
        $region51: #{tpu_custom_call.1} parent=31 // pred_region
          %s511 = ssub.s32 128, 128
          %512 = vsyncadd %s489, %s511
          %s513 = sadd.s32 %s33, %s32
          %s514 = smul.addr %s513, 128
          %s515 = scalar_lea.hbm %s4, %s514
          %s517 = sshll.u32 %s492, 4
          %s518 = int_to_ptr.vmem [resolvable:$true] %s517
          %520 = dma.vmem_to_hbm [thread:$0]  %s518, 128, %s515, %s489
        $region52: #{tpu_custom_call.1} parent=31 // pred_fallthru
          _
      $region32: #{tpu_custom_call.1} parent=5 // pred_fallthru
        _
      %p521 = scmp.le.s32.totalorder 2, %s23
      // Predicated region
      $region53: #{tpu_custom_call.1} parent=5 // pred_check
        %p522 = pneg %p521
      $region54: #{tpu_custom_call.1} parent=5 // pred_check_branch
        %524 = sbr.rel (%p522) target = $region56
      $region55: #{tpu_custom_call.1} parent=5 // pred_region
        %s525 = ssub.s32 %s23, 2
        // Predicated region
        $region57: #{tpu_custom_call.1} parent=55 // pred_check
          %p526 = pneg %p146
        $region58: #{tpu_custom_call.1} parent=55 // pred_check_branch
          %528 = sbr.rel (%p526) target = $region60
        $region59: #{tpu_custom_call.1} parent=55 // pred_region
          %s529 = sand.u32 %s131, 1
          %s530 = scalar_lea.sflag [#allocation4], %s529
          %s531 = sand.u32 %s131, 1
          %s532 = smul.addr %s531, 8
          %s533 = scalar_lea.vmem [#allocation8], %s532
          %534 = dma.done %s530, 128
        $region60: #{tpu_custom_call.1} parent=55 // pred_fallthru
          _
        // Predicated region
        $region61: #{tpu_custom_call.1} parent=55 // pred_check
          %p535 = pneg %p174
        $region62: #{tpu_custom_call.1} parent=55 // pred_check_branch
          %537 = sbr.rel (%p535) target = $region64
        $region63: #{tpu_custom_call.1} parent=55 // pred_region
          %s538 = sand.u32 %s159, 1
          %s539 = scalar_lea.sflag [#allocation10], %s538
          %s540 = sand.u32 %s159, 1
          %s541 = smul.addr %s540, 8
          %s542 = scalar_lea.vmem [#allocation9], %s541
          %543 = dma.done %s539, 128
        $region64: #{tpu_custom_call.1} parent=55 // pred_fallthru
          _
      $region56: #{tpu_custom_call.1} parent=5 // pred_fallthru
        _
    $region6: #{tpu_custom_call.1} parent=1 // loop_footer
      %s27 = sadd.s32 1, %s23
    $region7: #{tpu_custom_call.1} parent=1 // loop_footer_branch
      %22 = sbr.rel target = $region3
    $region8: #{tpu_custom_call.1} parent=1 // loop_exit
      _
    %544 = vsyncpa [#allocation3], 1
    %s545 = scalar_lea.sflag [#allocation3], 1
    %546 = vsyncpa %s545, 1
    %547 = vsyncpa [#allocation6], 1
    %s548 = scalar_lea.sflag [#allocation6], 1
    %549 = vsyncpa %s548, 1
    %550 = vsyncpa [#allocation4], 1
    %s551 = scalar_lea.sflag [#allocation4], 1
    %552 = vsyncpa %s551, 1
    %553 = vsyncpa [#allocation10], 1
    %s554 = scalar_lea.sflag [#allocation10], 1
    %555 = vsyncpa %s554, 1

</llo_original>
